<compile_context>
chip_gen: v7x
topology: tpu7x:2x2x1
jax: 0.10.0
libtpu: 0.0.40
codegen_flags: <defaults>
</compile_context>

<pallas_src>
import functools

import jax
import jax.numpy as jnp
from jax.experimental import pallas as pl
from jax.experimental.pallas import tpu as pltpu

# Coefficients produced by calculate_theta2(d=2) (Bernstein basis), hardcoded
# so the script needs no sympy/scipy.
THETAS_G = (
    (3.0, -3.0, 0.75),   # conv1
    (0.0, 3.0, -1.5),    # conv2
    (0.0, 0.0, 0.75),    # conv3
)
THETAS_KNN = ((1.0, 1.0, 1.0),) * 3   # convk1..convk3

_MiB = 1024 * 1024


def _round_up(v, m):
    return -(-v // m) * m


def _pad_to(a, shape):
    out = jnp.zeros(shape, a.dtype)
    return out.at[tuple(slice(0, s) for s in a.shape)].set(a)


def _vmem_cap_bytes():
    cap = None
    try:
        info = pltpu.get_tpu_info()
        cap = getattr(info, "vmem_capacity_bytes", None)
    except Exception:
        cap = None
    if not cap:
        cap = 64 * _MiB            # conservative fallback (v7x-sized)
    return (int(cap) * 7) // 8     # leave headroom for compiler-internal scratch


# --------------------------------------------------------------------------
# Kernels
# --------------------------------------------------------------------------
def _mlp_kernel(x_ref, W1_ref, b1_ref, W2_ref, b2_ref, dg_ref, dk_ref,
                h_ref, hsg_ref, hsk_ref):
    """Shared MLP: h = relu(relu(x@W1+b1)@W2+b2); also emit d-scaled h."""
    f32, bf16 = jnp.float32, jnp.bfloat16
    h = jnp.maximum(
        jnp.dot(x_ref[...], W1_ref[...], preferred_element_type=f32) + b1_ref[...],
        0.0)
    h = jnp.maximum(
        jnp.dot(h.astype(bf16), W2_ref[...], preferred_element_type=f32) + b2_ref[...],
        0.0)
    h_ref[...] = h.astype(bf16)
    hsg_ref[...] = (h * dg_ref[...]).astype(bf16)
    hsk_ref[...] = (h * dk_ref[...]).astype(bf16)


def _hop1_kernel(Ag_ref, Ak_ref, hsg_ref, hsk_ref, h_ref, dg_ref, dk_ref,
                 R0_ref, R1g_ref, R1k_ref,
                 F1g_ref, F1gs_ref, F1k_ref, F1ks_ref):
    """First graph hop for both graphs.

    prop1 = d ⊙ (A_rows @ (d ⊙ h));  F1 (lane-packed 3 conv blocks) is built
    with two tiny replication matmuls: F1 = h@R0 + prop1@R1
    (R0 replicates h into the 3 blocks; R1 holds -diag1 per block).
    Also emits F1s = d ⊙ F1 (bf16) for the second hop.
    """
    f32, bf16 = jnp.float32, jnp.bfloat16
    base = jnp.dot(h_ref[...], R0_ref[...], preferred_element_type=f32)   # (TN, P3)

    def one(A_ref, hs_ref, d_ref, R1_ref, F1_out, F1s_out):
        d = d_ref[...]
        prop1 = jnp.dot(A_ref[...], hs_ref[...], preferred_element_type=f32) * d
        F1 = base + jnp.dot(prop1.astype(bf16), R1_ref[...],
                            preferred_element_type=f32)
        F1_out[...] = F1.astype(bf16)
        F1s_out[...] = (F1 * d).astype(bf16)

    one(Ag_ref, hsg_ref, dg_ref, R1g_ref, F1g_ref, F1gs_ref)
    one(Ak_ref, hsk_ref, dk_ref, R1k_ref, F1k_ref, F1ks_ref)


def _hop2_kernel(Ag_ref, Ak_ref, F1gs_ref, F1ks_ref, F1g_ref, F1k_ref,
                 h_ref, dg_ref, dk_ref,
                 GK_ref, W3_ref, Wk_ref, b3_ref, bk_ref,
                 TAg_ref, TBg_ref, TAk_ref, TBk_ref,
                 Wa1_ref, ba1_ref,
                 ho_ref, hk_ref, psum_ref, *, n_valid):
    """Second hop + folded k0 + linear3/linear_knn + attention pass 1."""
    f32, bf16 = jnp.float32, jnp.bfloat16
    TN, Hp = ho_ref.shape

    # h @ [G0 | K0] as one 256-wide matmul (feeds the 256-wide MXU better).
    hGK = jnp.dot(h_ref[...], GK_ref[...], preferred_element_type=f32)    # (TN, 2Hp)

    def one(A_ref, F1s_full_ref, F1_ref, d_ref, TA_ref, TB_ref, W_ref, b_ref, k0):
        prop2 = jnp.dot(A_ref[...], F1s_full_ref[...],
                        preferred_element_type=f32) * d_ref[...]          # (TN, P3)
        S = TA_ref[...] * F1_ref[...].astype(f32) - TB_ref[...] * prop2
        return jnp.maximum(
            k0 + jnp.dot(S.astype(bf16), W_ref[...], preferred_element_type=f32)
            + b_ref[...],
            0.0)

    h_o = one(Ag_ref, F1gs_ref, F1g_ref, dg_ref, TAg_ref, TBg_ref,
              W3_ref, b3_ref, hGK[:, :Hp])
    h_k = one(Ak_ref, F1ks_ref, F1k_ref, dk_ref, TAk_ref, TBk_ref,
              Wk_ref, bk_ref, hGK[:, Hp:])
    ho_ref[...] = h_o
    hk_ref[...] = h_k

    # Component-attention pass 1: per-tile node-sums of tanh(z @ Wa1 + ba1),
    # stacking [h_o; h_knn] along rows so one matmul feeds both branches.
    # Padded rows (global index >= n_valid) are masked out of the sums.
    z = jnp.concatenate([h_o, h_k], axis=0).astype(bf16)                  # (2TN, Hp)
    t = jnp.tanh(jnp.dot(z, Wa1_ref[...], preferred_element_type=f32) + ba1_ref[...])
    rows = jax.lax.broadcasted_iota(jnp.int32, (TN, 1), 0) + pl.program_id(0) * TN
    mask = (rows < n_valid).astype(f32)
    t = t * jnp.concatenate([mask, mask], axis=0)
    s_o = jnp.sum(t[:TN], axis=0, keepdims=True)                          # (1, Hp)
    s_k = jnp.sum(t[TN:], axis=0, keepdims=True)
    psum_ref[0] = jnp.concatenate([s_o, s_k], axis=0)                     # (2, Hp)


# --------------------------------------------------------------------------
# Wrapper
# --------------------------------------------------------------------------
def mgepc_forward(x, A_g, A_knn, params, *, tile_rows=256):
    """Eval-mode MGEPC.forward -> (logits, emb) via row-tiled Pallas kernels."""
    f32, bf16 = jnp.float32, jnp.bfloat16
    N, in_feats = x.shape
    H = params["W1"].shape[1]
    Hp = _round_up(H, 128)
    P3 = _round_up(3 * H, 128)          # packed width of the 3 conv blocks
    Fp = _round_up(in_feats, 128)

    cap = _vmem_cap_bytes()

    # VMEM budget per call (double-buffer every pallas-managed buffer, count
    # resident operands too, add slack for in-kernel f32 intermediates).
    def plan(tn):
        np_ = _round_up(N, tn)
        dbl = 2
        b = dbl * (2 * tn * np_ * 2           # A_g / A_knn row slabs (bf16)
                   + 2 * np_ * Hp * 2         # resident d-scaled features
                   + 3 * Hp * P3 * 2          # R0 / R1g / R1k
                   + tn * Hp * 2 + 2 * tn * 4
                   + 4 * tn * P3 * 2)         # four F1 output tiles
        b += 4 * tn * P3 * 4
        c = dbl * (2 * tn * np_ * 2
                   + 2 * np_ * P3 * 2         # resident d-scaled F1 (both graphs)
                   + (2 * Hp * Hp + 2 * P3 * Hp + Hp * Hp + 6 * Hp) * 2
                   + 2 * tn * P3 * 2 + tn * Hp * 2 + 2 * tn * 4
                   + 2 * tn * Hp * 4 + 2 * Hp * 4)
        c += (2 * tn * P3 + 10 * tn * Hp) * 4
        return np_, b + 8 * _MiB, c + 8 * _MiB

    TN = min(_round_up(max(tile_rows, 8), 8), _round_up(N, 8))
    Np, bud_b, bud_c = plan(TN)
    while TN > 8 and max(bud_b, bud_c) > cap:
        TN = max(8, _round_up(TN // 2, 8))
        Np, bud_b, bud_c = plan(TN)
    n_tiles = Np // TN

    # ---- adjacency prep: zero-pad to (Np,Np), degrees, bf16 cast.  The
    #      symmetric normalization itself is applied in-kernel on the
    #      feature side (d ⊙ (A @ (d ⊙ x))) -- no normalized N^2 pre-pass.
    def prep(A):
        Ap = _pad_to(A.astype(f32), (Np, Np))
        d = jnp.power(jnp.clip(jnp.sum(Ap, axis=1, keepdims=True), 1.0, None), -0.5)
        return Ap.astype(bf16), d

    Ag, dg = prep(A_g)
    Ak, dk = prep(A_knn)

    xp = _pad_to(x.astype(f32), (Np, Fp)).astype(bf16)

    # ---- dense weights: lane-dense, bf16 for the MXU; biases stay f32.
    W1p = _pad_to(params["W1"], (Fp, Hp)).astype(bf16)
    b1p = _pad_to(params["b1"], (1, Hp))
    W2p = _pad_to(params["W2"], (Hp, Hp)).astype(bf16)
    b2p = _pad_to(params["b2"], (1, Hp))

    cdiag, cW, cb = params["cdiag"], params["cW"], params["cb"]

    def fold_k0(conv_ids, thetas, Wcat, bcat):
        """Fold k=0 linears / diag0 / theta0 + per-conv biases of 3 PolyConvs
        into one (H,H) matrix + effective bias, and pack W3/Wknn row-blocks
        into the lane-packed (P3, Hp) layout (all folds done in f32)."""
        M0 = jnp.zeros((H, H), f32)
        b_eff = bcat.reshape(1, H).astype(f32)
        Wp = jnp.zeros((P3, Hp), f32)
        for j, ci in enumerate(conv_ids):
            sl = Wcat[j * H:(j + 1) * H, :]                         # (H, H)
            if thetas[j][0] != 0.0:
                M0 = M0 + thetas[j][0] * (cdiag[ci, 0][:, None] * (cW[ci] @ sl))
            b_eff = b_eff + cb[ci][None, :] @ sl
            Wp = Wp.at[j * H:j * H + H, :H].set(sl)
        return M0, b_eff, Wp

    G0, b3eff, W3p = fold_k0((0, 1, 2), THETAS_G, params["W3"], params["b3"])
    K0, bkeff, Wkp = fold_k0((3, 4, 5), THETAS_KNN, params["Wknn"], params["bknn"])
    GK = jnp.concatenate([_pad_to(G0, (Hp, Hp)), _pad_to(K0, (Hp, Hp))],
                         axis=1).astype(bf16)                       # (Hp, 2Hp)
    b3eff = _pad_to(b3eff, (1, Hp))
    bkeff = _pad_to(bkeff, (1, Hp))
    W3p = W3p.astype(bf16)
    Wkp = Wkp.astype(bf16)

    # Replication matrices: map (h | prop1) -> lane-packed F1 = h@R0 + prop1@R1.
    def rep_mat(vals3):
        R = jnp.zeros((Hp, P3), f32)
        idx = jnp.arange(H)
        for i in range(3):
            R = R.at[idx, i * H + idx].set(vals3[i])
        return R.astype(bf16)

    R0 = rep_mat(jnp.ones((3, H), f32))
    R1g = rep_mat(-cdiag[jnp.array([0, 1, 2]), 1, :])
    R1k = rep_mat(-cdiag[jnp.array([3, 4, 5]), 1, :])

    # Lane vectors baking theta1/theta2 (and diag2) into S = TA*F1 - TB*prop2.
    def lane_vec(vals3):
        v = jnp.zeros((1, P3), f32)
        for i in range(3):
            v = v.at[0, i * H:(i + 1) * H].set(vals3[i])
        return v

    TAg = lane_vec([jnp.full((H,), THETAS_G[i][1] + THETAS_G[i][2], f32)
                    for i in range(3)])
    TBg = lane_vec([THETAS_G[i][2] * cdiag[i, 2] for i in range(3)])
    TAk = lane_vec([jnp.full((H,), THETAS_KNN[i][1] + THETAS_KNN[i][2], f32)
                    for i in range(3)])
    TBk = lane_vec([THETAS_KNN[i][2] * cdiag[3 + i, 2] for i in range(3)])

    Wa1p = _pad_to(params["Wa1"], (Hp, Hp)).astype(bf16)
    ba1p = _pad_to(params["ba1"], (1, Hp))
    wa2p = _pad_to(params["wa2"], (1, Hp))

    # ---- BlockSpec helpers -------------------------------------------------
    def tiled(w):
        return pl.BlockSpec((TN, w), lambda i: (i, 0))

    def full(arr):
        r, c = arr.shape
        return pl.BlockSpec((r, c), lambda i: (0, 0))

    grid = (n_tiles,)
    par = ("parallel",)

    # ---- call A: shared MLP -------------------------------------------------
    h_bf, hsg, hsk = pl.pallas_call(
        _mlp_kernel,
        grid=grid,
        in_specs=[tiled(Fp), full(W1p), full(b1p), full(W2p), full(b2p),
                  tiled(1), tiled(1)],
        out_specs=(tiled(Hp), tiled(Hp), tiled(Hp)),
        out_shape=(jax.ShapeDtypeStruct((Np, Hp), bf16),) * 3,
        compiler_params=pltpu.CompilerParams(
            dimension_semantics=par, vmem_limit_bytes=min(cap, 32 * _MiB)),
    )(xp, W1p, b1p, W2p, b2p, dg, dk)

    # ---- call B: hop 1 (both graphs), streamed adjacency --------------------
    F1g, F1gs, F1k, F1ks = pl.pallas_call(
        _hop1_kernel,
        grid=grid,
        in_specs=[tiled(Np), tiled(Np),
                  full(hsg), full(hsk), tiled(Hp), tiled(1), tiled(1),
                  full(R0), full(R1g), full(R1k)],
        out_specs=(tiled(P3),) * 4,
        out_shape=(jax.ShapeDtypeStruct((Np, P3), bf16),) * 4,
        compiler_params=pltpu.CompilerParams(
            dimension_semantics=par,
            vmem_limit_bytes=int(min(cap, max(32 * _MiB, bud_b)))),
    )(Ag, Ak, hsg, hsk, h_bf, dg, dk, R0, R1g, R1k)

    # ---- call C: hop 2 + heads + attention pass 1 ---------------------------
    ho_f, hk_f, psum = pl.pallas_call(
        functools.partial(_hop2_kernel, n_valid=N),
        grid=grid,
        in_specs=[tiled(Np), tiled(Np),
                  full(F1gs), full(F1ks), tiled(P3), tiled(P3),
                  tiled(Hp), tiled(1), tiled(1),
                  full(GK), full(W3p), full(Wkp), full(b3eff), full(bkeff),
                  full(TAg), full(TBg), full(TAk), full(TBk),
                  full(Wa1p), full(ba1p)],
        out_specs=(tiled(Hp), tiled(Hp),
                   pl.BlockSpec((1, 2, Hp), lambda i: (i, 0, 0))),
        out_shape=(jax.ShapeDtypeStruct((Np, Hp), f32),
                   jax.ShapeDtypeStruct((Np, Hp), f32),
                   jax.ShapeDtypeStruct((n_tiles, 2, Hp), f32)),
        compiler_params=pltpu.CompilerParams(
            dimension_semantics=par,
            vmem_limit_bytes=int(min(cap, max(32 * _MiB, bud_c)))),
    )(Ag, Ak, F1gs, F1ks, F1g, F1k, h_bf, dg, dk,
      GK, W3p, Wkp, b3eff, bkeff, TAg, TBg, TAk, TBk, Wa1p, ba1p)

    # ---- epilogue (XLA): attention pass 2 (softmax of the global mean),
    #      convex combine and the tiny (H,C) logits GEMM on the sliced emb.
    sums = jnp.sum(psum, axis=0)                                    # (2, Hp)
    w = (sums @ wa2p.T) / jnp.float32(N)                            # (2, 1)
    beta = jax.nn.softmax(w, axis=0)
    h_o = ho_f[:N, :H]
    h_k = hk_f[:N, :H]
    emb = beta[0, 0] * h_o + beta[1, 0] * h_k
    logits = emb @ params["W4"] + params["b4"]
    return logits, emb


# --------------------------------------------------------------------------
# Pure-JAX reference (for correctness check)
# --------------------------------------------------------------------------
def _polyconv_ref(A, Dinv, feat, theta, diag, Wc, bc):
    h = (theta[0] * feat * diag[0]) @ Wc + bc
    for k in range(1, len(theta)):
        prop = A @ (feat * Dinv)
        feat = feat - (prop * Dinv) * diag[k]
        h = h + theta[k] * feat
    return h


def mgepc_reference(x, A_g, A_knn, params):
    p = params
    Dg = jnp.power(jnp.clip(jnp.sum(A_g, axis=1, keepdims=True), 1.0, None), -0.5)
    Dk = jnp.power(jnp.clip(jnp.sum(A_knn, axis=1, keepdims=True), 1.0, None), -0.5)
    h = jax.nn.relu(x @ p["W1"] + p["b1"])
    h = jax.nn.relu(h @ p["W2"] + p["b2"])
    parts = [_polyconv_ref(A_g, Dg, h, THETAS_G[i],
                           p["cdiag"][i], p["cW"][i], p["cb"][i]) for i in range(3)]
    h_o = jax.nn.relu(jnp.concatenate(parts, -1) @ p["W3"] + p["b3"])
    partsk = [_polyconv_ref(A_knn, Dk, h, THETAS_KNN[i],
                            p["cdiag"][3 + i], p["cW"][3 + i], p["cb"][3 + i])
              for i in range(3)]
    h_knn = jax.nn.relu(jnp.concatenate(partsk, -1) @ p["Wknn"] + p["bknn"])
    z = jnp.stack([h_o, h_knn], axis=1)                            # [N, 2, H]
    w = jnp.mean(jnp.tanh(z @ p["Wa1"] + p["ba1"]) @ p["wa2"].T, axis=0)   # [2, 1]
    beta = jax.nn.softmax(w, axis=0)                               # [2, 1]
    emb = jnp.sum(beta[None] * z, axis=1)                          # [N, H]
    logits = emb @ p["W4"] + p["b4"]
    return logits, emb


if __name__ == "__main__":
    N, in_feats, H, C = 16, 8, 32, 2

    key = jax.random.PRNGKey(0)
    ks = jax.random.split(key, 18)
    f32 = jnp.float32

    x = jax.random.normal(ks[0], (N, in_feats), f32)
    A_g = (jax.random.uniform(ks[1], (N, N)) < 0.3).astype(f32)
    A_knn = (jax.random.uniform(ks[2], (N, N)) < 0.3).astype(f32)

    s = 0.1
    params = {
        "W1":   s * jax.random.normal(ks[3], (in_feats, H), f32),
        "b1":   s * jax.random.normal(ks[4], (1, H), f32),
        "W2":   s * jax.random.normal(ks[5], (H, H), f32),
        "b2":   s * jax.random.normal(ks[6], (1, H), f32),
        # 6 PolyConvs (3 on g, 3 on knng): learnable_diag ~ U(0,1) like torch.rand,
        # per-conv linear weight and zero bias.
        "cdiag": jax.random.uniform(ks[7], (6, 3, H), f32),
        "cW":    s * jax.random.normal(ks[8], (6, H, H), f32),
        "cb":    jnp.zeros((6, H), f32),
        "W3":   s * jax.random.normal(ks[9], (3 * H, H), f32),
        "b3":   s * jax.random.normal(ks[10], (1, H), f32),
        "Wknn": s * jax.random.normal(ks[11], (3 * H, H), f32),
        "bknn": s * jax.random.normal(ks[12], (1, H), f32),
        # ComponentAttention: Linear(H, H) + tanh + Linear(H, 1, bias=False)
        "Wa1":  s * jax.random.normal(ks[13], (H, H), f32),
        "ba1":  s * jax.random.normal(ks[14], (1, H), f32),
        "wa2":  s * jax.random.normal(ks[15], (1, H), f32),
        "W4":   s * jax.random.normal(ks[16], (H, C), f32),
        "b4":   s * jax.random.normal(ks[17], (1, C), f32),
    }

    logits, emb = jax.block_until_ready(mgepc_forward(x, A_g, A_knn, params))
    ref_logits, ref_emb = jax.block_until_ready(mgepc_reference(x, A_g, A_knn, params))

    assert logits.shape == (N, C) and emb.shape == (N, H)
    assert jnp.allclose(logits, ref_logits, atol=5e-2, rtol=5e-2)
    assert jnp.allclose(emb, ref_emb, atol=5e-2, rtol=5e-2)
    print("KERNEL_OK")
</pallas_src>

<mosaic_0001>
module attributes {stable_mosaic.version = 11 : i64} {
  func.func @_mlp_kernel(%arg0: i32, %arg1: memref<16x128xbf16, #tpu.memory_space<vmem>>, %arg2: memref<128x128xbf16, #tpu.memory_space<vmem>>, %arg3: memref<1x128xf32, #tpu.memory_space<vmem>>, %arg4: memref<128x128xbf16, #tpu.memory_space<vmem>>, %arg5: memref<1x128xf32, #tpu.memory_space<vmem>>, %arg6: memref<16x1xf32, #tpu.memory_space<vmem>>, %arg7: memref<16x1xf32, #tpu.memory_space<vmem>>, %arg8: memref<16x128xbf16, #tpu.memory_space<vmem>>, %arg9: memref<16x128xbf16, #tpu.memory_space<vmem>>, %arg10: memref<16x128xbf16, #tpu.memory_space<vmem>>) attributes {dimension_semantics = [#tpu.dimension_semantics<parallel>], iteration_bounds = array<i64: 1>, scalar_prefetch = 0 : i64, scratch_operands = 0 : i64, tpu.core_type = #tpu.core_type<tc>, window_params = [{transform_indices = @transform_0, window_bounds = array<i64: 16, 128>}, {pipeline_mode = #tpu.pipeline_mode<synchronous>, transform_indices = @transform_1, window_bounds = array<i64: 128, 128>}, {pipeline_mode = #tpu.pipeline_mode<synchronous>, transform_indices = @transform_2, window_bounds = array<i64: 1, 128>}, {pipeline_mode = #tpu.pipeline_mode<synchronous>, transform_indices = @transform_3, window_bounds = array<i64: 128, 128>}, {pipeline_mode = #tpu.pipeline_mode<synchronous>, transform_indices = @transform_4, window_bounds = array<i64: 1, 128>}, {transform_indices = @transform_5, window_bounds = array<i64: 16, 1>}, {transform_indices = @transform_6, window_bounds = array<i64: 16, 1>}, {transform_indices = @transform_7, window_bounds = array<i64: 16, 128>}, {transform_indices = @transform_8, window_bounds = array<i64: 16, 128>}, {transform_indices = @transform_9, window_bounds = array<i64: 16, 128>}]} {
    %c0 = arith.constant 0 : index
    %c0_0 = arith.constant 0 : index
    %0 = vector.load %arg1[%c0, %c0_0] : memref<16x128xbf16, #tpu.memory_space<vmem>>, vector<16x128xbf16>
    %c0_1 = arith.constant 0 : index
    %c0_2 = arith.constant 0 : index
    %1 = vector.load %arg2[%c0_1, %c0_2] : memref<128x128xbf16, #tpu.memory_space<vmem>>, vector<128x128xbf16>
    %cst = arith.constant dense<0.000000e+00> : vector<16x128xf32>
    %2 = tpu.matmul %0, %1, %cst {dimension_numbers = #tpu.dot_dimension_numbers<[1], [0], [0], [1], [0, 0, 1, 1], [], []>} : vector<16x128xbf16>, vector<128x128xbf16>, vector<16x128xf32> -> vector<16x128xf32>
    %c0_3 = arith.constant 0 : index
    %c0_4 = arith.constant 0 : index
    %3 = vector.load %arg3[%c0_3, %c0_4] : memref<1x128xf32, #tpu.memory_space<vmem>>, vector<1x128xf32>
    %4 = vector.broadcast %3 : vector<1x128xf32> to vector<16x128xf32>
    %5 = arith.addf %2, %4 : vector<16x128xf32>
    %cst_5 = arith.constant 0.000000e+00 : f32
    %6 = vector.broadcast %cst_5 : f32 to vector<16x128xf32>
    %7 = arith.maximumf %5, %6 : vector<16x128xf32>
    %8 = arith.truncf %7 : vector<16x128xf32> to vector<16x128xbf16>
    %c0_6 = arith.constant 0 : index
    %c0_7 = arith.constant 0 : index
    %9 = vector.load %arg4[%c0_6, %c0_7] : memref<128x128xbf16, #tpu.memory_space<vmem>>, vector<128x128xbf16>
    %cst_8 = arith.constant dense<0.000000e+00> : vector<16x128xf32>
    %10 = tpu.matmul %8, %9, %cst_8 {dimension_numbers = #tpu.dot_dimension_numbers<[1], [0], [0], [1], [0, 0, 1, 1], [], []>} : vector<16x128xbf16>, vector<128x128xbf16>, vector<16x128xf32> -> vector<16x128xf32>
    %c0_9 = arith.constant 0 : index
    %c0_10 = arith.constant 0 : index
    %11 = vector.load %arg5[%c0_9, %c0_10] : memref<1x128xf32, #tpu.memory_space<vmem>>, vector<1x128xf32>
    %12 = vector.broadcast %11 : vector<1x128xf32> to vector<16x128xf32>
    %13 = arith.addf %10, %12 : vector<16x128xf32>
    %cst_11 = arith.constant 0.000000e+00 : f32
    %14 = vector.broadcast %cst_11 : f32 to vector<16x128xf32>
    %15 = arith.maximumf %13, %14 : vector<16x128xf32>
    %16 = arith.truncf %15 : vector<16x128xf32> to vector<16x128xbf16>
    %c0_12 = arith.constant 0 : index
    %c0_13 = arith.constant 0 : index
    %17 = vector.load %arg8[%c0_12, %c0_13] : memref<16x128xbf16, #tpu.memory_space<vmem>>, vector<16x128xbf16>
    tpu.vector_store %arg8[%c0_12, %c0_13], %16 {strides = array<i32>} : memref<16x128xbf16, #tpu.memory_space<vmem>>, vector<16x128xbf16>,
    %c0_14 = arith.constant 0 : index
    %c0_15 = arith.constant 0 : index
    %18 = vector.load %arg6[%c0_14, %c0_15] : memref<16x1xf32, #tpu.memory_space<vmem>>, vector<16x1xf32>
    %19 = vector.broadcast %18 : vector<16x1xf32> to vector<16x128xf32>
    %20 = arith.mulf %15, %19 : vector<16x128xf32>
    %21 = arith.truncf %20 : vector<16x128xf32> to vector<16x128xbf16>
    %c0_16 = arith.constant 0 : index
    %c0_17 = arith.constant 0 : index
    %22 = vector.load %arg9[%c0_16, %c0_17] : memref<16x128xbf16, #tpu.memory_space<vmem>>, vector<16x128xbf16>
    tpu.vector_store %arg9[%c0_16, %c0_17], %21 {strides = array<i32>} : memref<16x128xbf16, #tpu.memory_space<vmem>>, vector<16x128xbf16>,
    %c0_18 = arith.constant 0 : index
    %c0_19 = arith.constant 0 : index
    %23 = vector.load %arg7[%c0_18, %c0_19] : memref<16x1xf32, #tpu.memory_space<vmem>>, vector<16x1xf32>
    %24 = vector.broadcast %23 : vector<16x1xf32> to vector<16x128xf32>
    %25 = arith.mulf %15, %24 : vector<16x128xf32>
    %26 = arith.truncf %25 : vector<16x128xf32> to vector<16x128xbf16>
    %c0_20 = arith.constant 0 : index
    %c0_21 = arith.constant 0 : index
    %27 = vector.load %arg10[%c0_20, %c0_21] : memref<16x128xbf16, #tpu.memory_space<vmem>>, vector<16x128xbf16>
    tpu.vector_store %arg10[%c0_20, %c0_21], %26 {strides = array<i32>} : memref<16x128xbf16, #tpu.memory_space<vmem>>, vector<16x128xbf16>,
    return
  }
  func.func @transform_0(%arg0: i32) -> (i32, i32) {
    %c0_i32 = arith.constant 0 : i32
    %c0_i32_0 = arith.constant 0 : i32
    return %arg0, %c0_i32 : i32, i32
  }
  func.func @transform_1(%arg0: i32) -> (i32, i32) {
    %c0_i32 = arith.constant 0 : i32
    %c0_i32_0 = arith.constant 0 : i32
    %c0_i32_1 = arith.constant 0 : i32
    return %c0_i32, %c0_i32_0 : i32, i32
  }
  func.func @transform_2(%arg0: i32) -> (i32, i32) {
    %c0_i32 = arith.constant 0 : i32
    %c0_i32_0 = arith.constant 0 : i32
    %c0_i32_1 = arith.constant 0 : i32
    return %c0_i32, %c0_i32_0 : i32, i32
  }
  func.func @transform_3(%arg0: i32) -> (i32, i32) {
    %c0_i32 = arith.constant 0 : i32
    %c0_i32_0 = arith.constant 0 : i32
    %c0_i32_1 = arith.constant 0 : i32
    return %c0_i32, %c0_i32_0 : i32, i32
  }
  func.func @transform_4(%arg0: i32) -> (i32, i32) {
    %c0_i32 = arith.constant 0 : i32
    %c0_i32_0 = arith.constant 0 : i32
    %c0_i32_1 = arith.constant 0 : i32
    return %c0_i32, %c0_i32_0 : i32, i32
  }
  func.func @transform_5(%arg0: i32) -> (i32, i32) {
    %c0_i32 = arith.constant 0 : i32
    %c0_i32_0 = arith.constant 0 : i32
    return %arg0, %c0_i32 : i32, i32
  }
  func.func @transform_6(%arg0: i32) -> (i32, i32) {
    %c0_i32 = arith.constant 0 : i32
    %c0_i32_0 = arith.constant 0 : i32
    return %arg0, %c0_i32 : i32, i32
  }
  func.func @transform_7(%arg0: i32) -> (i32, i32) {
    %c0_i32 = arith.constant 0 : i32
    %c0_i32_0 = arith.constant 0 : i32
    return %arg0, %c0_i32 : i32, i32
  }
  func.func @transform_8(%arg0: i32) -> (i32, i32) {
    %c0_i32 = arith.constant 0 : i32
    %c0_i32_0 = arith.constant 0 : i32
    return %arg0, %c0_i32 : i32, i32
  }
  func.func @transform_9(%arg0: i32) -> (i32, i32) {
    %c0_i32 = arith.constant 0 : i32
    %c0_i32_0 = arith.constant 0 : i32
    return %arg0, %c0_i32 : i32, i32
  }
}

</mosaic_0001>

<llo_original>
// kernel: tpu_custom_call.1
$region0: #{tpu_custom_call.1}
  #allocation0 [shape = 'u32[]', space=smem, size = 0x4, offset = 0x4, fixed_abs, tag = 'smem constant byte address 0x4 - core index']
  #allocation1 [shape = 'u32[144,128]{1,0:T(1,128)}', space=vmem, size = 0x12000, scoped, tag = 'internal scratch']
  %s0 = inlined_call_operand.vmem [shape: bf16[16,128], index: 0, kind: input, shape index: {}]
  %s1 = inlined_call_operand.hbm [shape: bf16[128,128], index: 1, kind: input, shape index: {}]
  %s2 = inlined_call_operand.vmem [shape: f32[1,128], index: 2, kind: input, shape index: {}]
  %s3 = inlined_call_operand.hbm [shape: bf16[128,128], index: 3, kind: input, shape index: {}]
  %s4 = inlined_call_operand.vmem [shape: f32[1,128], index: 4, kind: input, shape index: {}]
  %s5 = inlined_call_operand.vmem [shape: f32[16,1], index: 5, kind: input, shape index: {}]
  %s6 = inlined_call_operand.vmem [shape: f32[16,1], index: 6, kind: input, shape index: {}]
  %s7 = inlined_call_operand.hbm [shape: bf16[16,128], index: 7, kind: output, shape index: {0}]
  %s8 = inlined_call_operand.hbm [shape: bf16[16,128], index: 8, kind: output, shape index: {1}]
  %s9 = inlined_call_operand.hbm [shape: bf16[16,128], index: 9, kind: output, shape index: {2}]
  %10 = xla_tuple %s7, %s8, %s9
  %s11 = sld [smem:[#allocation0]]
  $region62: #{tpu_custom_call.1} parent=0
    _
  %s13 = ssub.s32 1, %s11
  %s14 = scalar_select 0, %s13, %s11
  $region1: #{tpu_custom_call.1} parent=0
    #allocation2 [shape = 'u8[32768]{0}', space=vmem, size = 0x8000, scoped, tag = 'input window, operand 1, single buffered']
    #allocation3 [shape = 's32[1]{0}', space=sflag, size = 0x4, scoped, tag = 'scoped memory for tpu_custom_call.1']
    #allocation4 [shape = 's32[1]{0}', space=sflag, size = 0x4, scoped, tag = 'scoped memory for tpu_custom_call.1']
    #allocation5 [shape = 'u8[32768]{0}', space=vmem, size = 0x8000, scoped, tag = 'input window, operand 3, single buffered']
    #allocation6 [shape = 's32[1]{0}', space=sflag, size = 0x4, scoped, tag = 'scoped memory for tpu_custom_call.1']
    #allocation7 [shape = 'u8[4096]{0}', space=vmem, size = 0x1000, scoped, tag = 'output window, operand 0, single buffered']
    #allocation8 [shape = 'u8[4096]{0}', space=vmem, size = 0x1000, scoped, tag = 'output window, operand 1, single buffered']
    #allocation9 [shape = 's32[1]{0}', space=sflag, size = 0x4, scoped, tag = 'scoped memory for tpu_custom_call.1']
    #allocation10 [shape = 'u8[4096]{0}', space=vmem, size = 0x1000, scoped, tag = 'output window, operand 2, single buffered']
    %15 = vsyncpa [#allocation3], 0
    %16 = vsyncpa [#allocation6], 0
    %17 = vsyncpa [#allocation4], 0
    %18 = vsyncpa [#allocation9], 0
    // Predicated region
    $region2: #{tpu_custom_call.1} parent=1 // pred_check
      _
    $region3: #{tpu_custom_call.1} parent=1 // pred_check_branch
      %20 = sbr.rel (0) target = $region5
    $region4: #{tpu_custom_call.1} parent=1 // pred_region
      _
    $region5: #{tpu_custom_call.1} parent=1 // pred_fallthru
      _
    // Predicated region
    $region6: #{tpu_custom_call.1} parent=1 // pred_check
      _
    $region7: #{tpu_custom_call.1} parent=1 // pred_check_branch
      %22 = sbr.rel (0) target = $region9
    $region8: #{tpu_custom_call.1} parent=1 // pred_region
      %s24 = ssub.s32 1024, 1024
      %25 = vsyncadd [#allocation3], %s24
      %s26 = sshll.u32 [#allocation2], 4
      %s27 = int_to_ptr.vmem [resolvable:$true] %s26
      %32 = dma.hbm_to_vmem [thread:$0]  %s1, 1024, %s27, [#allocation3], 64, 64, 4
    $region9: #{tpu_custom_call.1} parent=1 // pred_fallthru
      _
    // Predicated region
    $region10: #{tpu_custom_call.1} parent=1 // pred_check
      _
    $region11: #{tpu_custom_call.1} parent=1 // pred_check_branch
      %34 = sbr.rel (0) target = $region13
    $region12: #{tpu_custom_call.1} parent=1 // pred_region
      _
    $region13: #{tpu_custom_call.1} parent=1 // pred_fallthru
      _
    // Predicated region
    $region14: #{tpu_custom_call.1} parent=1 // pred_check
      _
    $region15: #{tpu_custom_call.1} parent=1 // pred_check_branch
      %36 = sbr.rel (0) target = $region17
    $region16: #{tpu_custom_call.1} parent=1 // pred_region
      %s38 = ssub.s32 1024, 1024
      %39 = vsyncadd [#allocation6], %s38
      %s40 = sshll.u32 [#allocation5], 4
      %s41 = int_to_ptr.vmem [resolvable:$true] %s40
      %46 = dma.hbm_to_vmem [thread:$0]  %s3, 1024, %s41, [#allocation6], 64, 64, 4
    $region17: #{tpu_custom_call.1} parent=1 // pred_fallthru
      _
    // Predicated region
    $region18: #{tpu_custom_call.1} parent=1 // pred_check
      _
    $region19: #{tpu_custom_call.1} parent=1 // pred_check_branch
      %48 = sbr.rel (0) target = $region21
    $region20: #{tpu_custom_call.1} parent=1 // pred_region
      _
    $region21: #{tpu_custom_call.1} parent=1 // pred_fallthru
      _
    // Predicated region
    $region22: #{tpu_custom_call.1} parent=1 // pred_check
      _
    $region23: #{tpu_custom_call.1} parent=1 // pred_check_branch
      %50 = sbr.rel (0) target = $region25
    $region24: #{tpu_custom_call.1} parent=1 // pred_region
      _
    $region25: #{tpu_custom_call.1} parent=1 // pred_fallthru
      _
    // Predicated region
    $region26: #{tpu_custom_call.1} parent=1 // pred_check
      _
    $region27: #{tpu_custom_call.1} parent=1 // pred_check_branch
      %52 = sbr.rel (0) target = $region29
    $region28: #{tpu_custom_call.1} parent=1 // pred_region
      _
    $region29: #{tpu_custom_call.1} parent=1 // pred_fallthru
      _
    // Predicated region
    $region30: #{tpu_custom_call.1} parent=1 // pred_check
      _
    $region31: #{tpu_custom_call.1} parent=1 // pred_check_branch
      %54 = sbr.rel (0) target = $region33
    $region32: #{tpu_custom_call.1} parent=1 // pred_region
      %55 = dma.done [#allocation3], 1024
    $region33: #{tpu_custom_call.1} parent=1 // pred_fallthru
      _
    // Predicated region
    $region34: #{tpu_custom_call.1} parent=1 // pred_check
      _
    $region35: #{tpu_custom_call.1} parent=1 // pred_check_branch
      %57 = sbr.rel (0) target = $region37
    $region36: #{tpu_custom_call.1} parent=1 // pred_region
      %58 = dma.done [#allocation6], 1024
    $region37: #{tpu_custom_call.1} parent=1 // pred_fallthru
      _
    %v60 = vld [vmem:[%s0] sm:$0xf]
    %v61 = vld [vmem:[%s0 + $0x4] sm:$0xf]
    %v62 = vld [vmem:[#allocation2] sm:$0xf]
    %v63 = vld [vmem:[#allocation2 + $0x4] sm:$0xf]
    %v64 = vld [vmem:[#allocation2 + $0x8] sm:$0xf]
    %v65 = vld [vmem:[#allocation2 + $0xc] sm:$0xf]
    %v66 = vld [vmem:[#allocation2 + $0x10] sm:$0xf]
    %v67 = vld [vmem:[#allocation2 + $0x14] sm:$0xf]
    %v68 = vld [vmem:[#allocation2 + $0x18] sm:$0xf]
    %v69 = vld [vmem:[#allocation2 + $0x1c] sm:$0xf]
    %v70 = vld [vmem:[#allocation2 + $0x20] sm:$0xf]
    %v71 = vld [vmem:[#allocation2 + $0x24] sm:$0xf]
    %v72 = vld [vmem:[#allocation2 + $0x28] sm:$0xf]
    %v73 = vld [vmem:[#allocation2 + $0x2c] sm:$0xf]
    %v74 = vld [vmem:[#allocation2 + $0x30] sm:$0xf]
    %v75 = vld [vmem:[#allocation2 + $0x34] sm:$0xf]
    %v76 = vld [vmem:[#allocation2 + $0x38] sm:$0xf]
    %v77 = vld [vmem:[#allocation2 + $0x3c] sm:$0xf]
    %v78 = vld [vmem:[%s2] sm:$0x1]
    %v80 = vlaneseq
    %v81 = vshrl.u32 %v80, 7
    %v82 = vsub.s32 0, %v81
    %v83 = vrot.slane %v78, %v82
    %v87 = vunpack.c.l.b16 %v60
    %v88 = vunpack.c.l.b16 %v61
    %v89 = vpack.c.b16 %v88, %v87
    %v107 = vunpack.c.l.b16 %v62
    %v108 = vunpack.c.l.b16 %v63
    %v109 = vunpack.c.l.b16 %v64
    %v110 = vunpack.c.l.b16 %v65
    %v111 = vunpack.c.l.b16 %v66
    %v112 = vunpack.c.l.b16 %v67
    %v113 = vunpack.c.l.b16 %v68
    %v114 = vunpack.c.l.b16 %v69
    %v115 = vunpack.c.l.b16 %v70
    %v116 = vunpack.c.l.b16 %v71
    %v117 = vunpack.c.l.b16 %v72
    %v118 = vunpack.c.l.b16 %v73
    %v119 = vunpack.c.l.b16 %v74
    %v120 = vunpack.c.l.b16 %v75
    %v121 = vunpack.c.l.b16 %v76
    %v122 = vunpack.c.l.b16 %v77
    %v123 = vpack.c.b16 %v108, %v107
    %v124 = vpack.c.b16 %v110, %v109
    %v125 = vpack.c.b16 %v112, %v111
    %v126 = vpack.c.b16 %v114, %v113
    %v127 = vpack.c.b16 %v116, %v115
    %v128 = vpack.c.b16 %v118, %v117
    %v129 = vpack.c.b16 %v120, %v119
    %v130 = vpack.c.b16 %v122, %v121
    %139 = vmatprep.subr.bf16.mxu0 0
    %140 = vmatpush1.bf16.msra.mxu0 %v123
    %141 = vmatprep.subr.bf16.mxu0 0
    %142 = vmatpush1.bf16.msra.mxu0 %v124
    %143 = vmatprep.subr.bf16.mxu0 0
    %144 = vmatpush1.bf16.msra.mxu0 %v125
    %145 = vmatprep.subr.bf16.mxu0 0
    %146 = vmatpush1.bf16.msra.mxu0 %v126
    %147 = vmatprep.subr.bf16.mxu0 0
    %148 = vmatpush1.bf16.msra.mxu0 %v127
    %149 = vmatprep.subr.bf16.mxu0 0
    %150 = vmatpush1.bf16.msra.mxu0 %v128
    %151 = vmatprep.subr.bf16.mxu0 0
    %152 = vmatpush1.bf16.msra.mxu0 %v129
    %153 = vmatprep.subr.bf16.mxu0 0
    %154 = vmatpush1.bf16.msra.mxu0 %v130
    %155 = vmatprep.subr.bf16.mxu0 0
    %156 = vmatpush1.bf16.msra.mxu0 0
    %157 = vmatprep.subr.bf16.mxu0 0
    %158 = vmatpush1.bf16.msra.mxu0 0
    %159 = vmatprep.subr.bf16.mxu0 0
    %160 = vmatpush1.bf16.msra.mxu0 0
    %161 = vmatprep.subr.bf16.mxu0 0
    %162 = vmatpush1.bf16.msra.mxu0 0
    %163 = vmatprep.subr.bf16.mxu0 0
    %164 = vmatpush1.bf16.msra.mxu0 0
    %165 = vmatprep.subr.bf16.mxu0 0
    %166 = vmatpush1.bf16.msra.mxu0 0
    %167 = vmatprep.subr.bf16.mxu0 0
    %168 = vmatpush1.bf16.msra.mxu0 0
    %169 = vmatprep.subr.bf16.mxu0 0
    %170 = vmatpush1.bf16.msra.mxu0 0
    %171 = vmatprep.mubr.bf16.mxu0 0
    %172 = vmatmul.mubr.bf16.gmra.mrb[0].mxu0 %v89
    %v173 = vpop.f32.mrb[0].mxu0
    %v174 = vadd.f32 %v83, %v173
    %v175 = vpop.f32.mrb[0].mxu0
    %v176 = vpop.f32.mrb[0].mxu0
    %v177 = vadd.f32 %v83, %v176
    %v178 = vpop.f32.mrb[0].mxu0
    %179 = vdwg.mxu0
    %v180 = vmax.f32 %v174, 0.0
    %v181 = vmax.f32 %v177, 0.0
    %v182 = vpack.c.bf16 %v181, %v180
    %v183 = vld [vmem:[#allocation5] sm:$0xf]
    %v184 = vld [vmem:[#allocation5 + $0x4] sm:$0xf]
    %v185 = vld [vmem:[#allocation5 + $0x8] sm:$0xf]
    %v186 = vld [vmem:[#allocation5 + $0xc] sm:$0xf]
    %v187 = vld [vmem:[#allocation5 + $0x10] sm:$0xf]
    %v188 = vld [vmem:[#allocation5 + $0x14] sm:$0xf]
    %v189 = vld [vmem:[#allocation5 + $0x18] sm:$0xf]
    %v190 = vld [vmem:[#allocation5 + $0x1c] sm:$0xf]
    %v191 = vld [vmem:[#allocation5 + $0x20] sm:$0xf]
    %v192 = vld [vmem:[#allocation5 + $0x24] sm:$0xf]
    %v193 = vld [vmem:[#allocation5 + $0x28] sm:$0xf]
    %v194 = vld [vmem:[#allocation5 + $0x2c] sm:$0xf]
    %v195 = vld [vmem:[#allocation5 + $0x30] sm:$0xf]
    %v196 = vld [vmem:[#allocation5 + $0x34] sm:$0xf]
    %v197 = vld [vmem:[#allocation5 + $0x38] sm:$0xf]
    %v198 = vld [vmem:[#allocation5 + $0x3c] sm:$0xf]
    %v199 = vld [vmem:[%s4] sm:$0x1]
    %v201 = vlaneseq
    %v202 = vshrl.u32 %v201, 7
    %v203 = vsub.s32 0, %v202
    %v204 = vrot.slane %v199, %v203
    %v222 = vunpack.c.l.b16 %v183
    %v223 = vunpack.c.l.b16 %v184
    %v224 = vunpack.c.l.b16 %v185
    %v225 = vunpack.c.l.b16 %v186
    %v226 = vunpack.c.l.b16 %v187
    %v227 = vunpack.c.l.b16 %v188
    %v228 = vunpack.c.l.b16 %v189
    %v229 = vunpack.c.l.b16 %v190
    %v230 = vunpack.c.l.b16 %v191
    %v231 = vunpack.c.l.b16 %v192
    %v232 = vunpack.c.l.b16 %v193
    %v233 = vunpack.c.l.b16 %v194
    %v234 = vunpack.c.l.b16 %v195
    %v235 = vunpack.c.l.b16 %v196
    %v236 = vunpack.c.l.b16 %v197
    %v237 = vunpack.c.l.b16 %v198
    %v238 = vpack.c.b16 %v223, %v222
    %v239 = vpack.c.b16 %v225, %v224
    %v240 = vpack.c.b16 %v227, %v226
    %v241 = vpack.c.b16 %v229, %v228
    %v242 = vpack.c.b16 %v231, %v230
    %v243 = vpack.c.b16 %v233, %v232
    %v244 = vpack.c.b16 %v235, %v234
    %v245 = vpack.c.b16 %v237, %v236
    %254 = vmatprep.subr.bf16.mxu0 0
    %255 = vmatpush1.bf16.msra.mxu0 %v238
    %256 = vmatprep.subr.bf16.mxu0 0
    %257 = vmatpush1.bf16.msra.mxu0 %v239
    %258 = vmatprep.subr.bf16.mxu0 0
    %259 = vmatpush1.bf16.msra.mxu0 %v240
    %260 = vmatprep.subr.bf16.mxu0 0
    %261 = vmatpush1.bf16.msra.mxu0 %v241
    %262 = vmatprep.subr.bf16.mxu0 0
    %263 = vmatpush1.bf16.msra.mxu0 %v242
    %264 = vmatprep.subr.bf16.mxu0 0
    %265 = vmatpush1.bf16.msra.mxu0 %v243
    %266 = vmatprep.subr.bf16.mxu0 0
    %267 = vmatpush1.bf16.msra.mxu0 %v244
    %268 = vmatprep.subr.bf16.mxu0 0
    %269 = vmatpush1.bf16.msra.mxu0 %v245
    %270 = vmatprep.subr.bf16.mxu0 0
    %271 = vmatpush1.bf16.msra.mxu0 0
    %272 = vmatprep.subr.bf16.mxu0 0
    %273 = vmatpush1.bf16.msra.mxu0 0
    %274 = vmatprep.subr.bf16.mxu0 0
    %275 = vmatpush1.bf16.msra.mxu0 0
    %276 = vmatprep.subr.bf16.mxu0 0
    %277 = vmatpush1.bf16.msra.mxu0 0
    %278 = vmatprep.subr.bf16.mxu0 0
    %279 = vmatpush1.bf16.msra.mxu0 0
    %280 = vmatprep.subr.bf16.mxu0 0
    %281 = vmatpush1.bf16.msra.mxu0 0
    %282 = vmatprep.subr.bf16.mxu0 0
    %283 = vmatpush1.bf16.msra.mxu0 0
    %284 = vmatprep.subr.bf16.mxu0 0
    %285 = vmatpush1.bf16.msra.mxu0 0
    %286 = vmatprep.mubr.bf16.mxu0 0
    %287 = vmatmul.mubr.bf16.gmra.mrb[0].mxu0 %v182
    %v288 = vpop.f32.mrb[0].mxu0
    %v289 = vadd.f32 %v204, %v288
    %v290 = vpop.f32.mrb[0].mxu0
    %v291 = vpop.f32.mrb[0].mxu0
    %v292 = vadd.f32 %v204, %v291
    %v293 = vpop.f32.mrb[0].mxu0
    %294 = vdwg.mxu0
    %v295 = vmax.f32 %v289, 0.0
    %v296 = vmax.f32 %v292, 0.0
    %v297 = vpack.c.bf16 %v296, %v295
    %v299 = vunpack.c.l.b16 %v297
    %v300 = vunpack.c.h.b16 %v297
    %v301 = vpack.c.b16 %v299, %v299
    %v302 = vpack.c.b16 %v300, %v300
    %305 = vst [vmem:[#allocation7] sm:$0xf] %v301
    %306 = vst [vmem:[#allocation7 + $0x4] sm:$0xf] %v302
    %v307 = vld [vmem:[%s5] sm:$0xff]
    %v308 = vld [vmem:[%s5 + $0x8] sm:$0xff]
    %310 = vset.pattern.permute.xlu0 0
    %311 = vperm.xlu0 %310, %v307
    %v312 = vpop.permute.xlu0 %311
    %315 = vset.pattern.permute.xlu0 0
    %316 = vperm.xlu0 %315, %v308
    %v317 = vpop.permute.xlu0 %316
    %v319 = vmul.f32 %v295, %v312
    %v320 = vmul.f32 %v296, %v317
    %v321 = vpack.c.bf16 %v320, %v319
    %v323 = vunpack.c.l.b16 %v321
    %v324 = vunpack.c.h.b16 %v321
    %v325 = vpack.c.b16 %v323, %v323
    %v326 = vpack.c.b16 %v324, %v324
    %329 = vst [vmem:[#allocation8] sm:$0xf] %v325
    %330 = vst [vmem:[#allocation8 + $0x4] sm:$0xf] %v326
    %v331 = vld [vmem:[%s6] sm:$0xff]
    %v332 = vld [vmem:[%s6 + $0x8] sm:$0xff]
    %334 = vset.pattern.permute.xlu0 0
    %335 = vperm.xlu0 %334, %v331
    %v336 = vpop.permute.xlu0 %335
    %339 = vset.pattern.permute.xlu0 0
    %340 = vperm.xlu0 %339, %v332
    %v341 = vpop.permute.xlu0 %340
    %v343 = vmul.f32 %v295, %v336
    %v344 = vmul.f32 %v296, %v341
    %v345 = vpack.c.bf16 %v344, %v343
    %v347 = vunpack.c.l.b16 %v345
    %v348 = vunpack.c.h.b16 %v345
    %v349 = vpack.c.b16 %v347, %v347
    %v350 = vpack.c.b16 %v348, %v348
    %353 = vst [vmem:[#allocation10] sm:$0xf] %v349
    %354 = vst [vmem:[#allocation10 + $0x4] sm:$0xf] %v350
    // Predicated region
    $region38: #{tpu_custom_call.1} parent=1 // pred_check
      _
    $region39: #{tpu_custom_call.1} parent=1 // pred_check_branch
      %356 = sbr.rel (0) target = $region41
    $region40: #{tpu_custom_call.1} parent=1 // pred_region
      %s358 = ssub.s32 128, 128
      %359 = vsyncadd [#allocation4], %s358
      %s360 = sshll.u32 [#allocation7], 4
      %s361 = int_to_ptr.vmem [resolvable:$true] %s360
      %366 = dma.vmem_to_hbm [thread:$0]  %s361, 128, %s7, [#allocation4], 64, 64, 4
    $region41: #{tpu_custom_call.1} parent=1 // pred_fallthru
      _
    // Predicated region
    $region42: #{tpu_custom_call.1} parent=1 // pred_check
      _
    $region43: #{tpu_custom_call.1} parent=1 // pred_check_branch
      %368 = sbr.rel (0) target = $region45
    $region44: #{tpu_custom_call.1} parent=1 // pred_region
      %s370 = ssub.s32 128, 128
      %371 = vsyncadd [#allocation9], %s370
      %s372 = sshll.u32 [#allocation8], 4
      %s373 = int_to_ptr.vmem [resolvable:$true] %s372
      %378 = dma.vmem_to_hbm [thread:$0]  %s373, 128, %s8, [#allocation9], 64, 64, 4
    $region45: #{tpu_custom_call.1} parent=1 // pred_fallthru
      _
    // Predicated region
    $region46: #{tpu_custom_call.1} parent=1 // pred_check
      _
    $region47: #{tpu_custom_call.1} parent=1 // pred_check_branch
      %380 = sbr.rel (0) target = $region49
    $region48: #{tpu_custom_call.1} parent=1 // pred_region
      %s382 = ssub.s32 128, 128
      %383 = vsyncadd [#allocation9], %s382
      %s384 = sshll.u32 [#allocation10], 4
      %s385 = int_to_ptr.vmem [resolvable:$true] %s384
      %390 = dma.vmem_to_hbm [thread:$0]  %s385, 128, %s9, [#allocation9], 64, 64, 4
    $region49: #{tpu_custom_call.1} parent=1 // pred_fallthru
      _
    // Predicated region
    $region50: #{tpu_custom_call.1} parent=1 // pred_check
      _
    $region51: #{tpu_custom_call.1} parent=1 // pred_check_branch
      %392 = sbr.rel (0) target = $region53
    $region52: #{tpu_custom_call.1} parent=1 // pred_region
      %393 = dma.done [#allocation4], 128
    $region53: #{tpu_custom_call.1} parent=1 // pred_fallthru
      _
    // Predicated region
    $region54: #{tpu_custom_call.1} parent=1 // pred_check
      _
    $region55: #{tpu_custom_call.1} parent=1 // pred_check_branch
      %395 = sbr.rel (0) target = $region57
    $region56: #{tpu_custom_call.1} parent=1 // pred_region
      %396 = dma.done [#allocation9], 128
    $region57: #{tpu_custom_call.1} parent=1 // pred_fallthru
      _
    // Predicated region
    $region58: #{tpu_custom_call.1} parent=1 // pred_check
      _
    $region59: #{tpu_custom_call.1} parent=1 // pred_check_branch
      %398 = sbr.rel (0) target = $region61
    $region60: #{tpu_custom_call.1} parent=1 // pred_region
      %399 = dma.done [#allocation9], 128
    $region61: #{tpu_custom_call.1} parent=1 // pred_fallthru
      _
    %400 = vsyncpa [#allocation3], 1
    %401 = vsyncpa [#allocation6], 1
    %402 = vsyncpa [#allocation4], 1
    %403 = vsyncpa [#allocation9], 1

</llo_original>
